<compile_context>
chip_gen: v6e
topology: v6e:2x2x1
jax: 0.10.0
libtpu: 0.0.40
codegen_flags: <defaults>
</compile_context>

<pallas_src>
import functools

import jax
import jax.numpy as jnp
from jax.experimental import pallas as pl
from jax.experimental.pallas import tpu as pltpu

LANES = 128
BLOCK_ROWS = 2048  # (2048, 128) f32 tile = 1 MiB -> 4 MiB with in+out double-buffered


def _qdq_kernel(x_ref, o_ref, *, inv_scale, scale, zero_point,
                quant_min, quant_max):
    """Elementwise quantize->dequantize on one (block_rows, 128) VMEM tile."""
    x = x_ref[...]
    # quantize_per_tensor: round(x * (1/scale)) + zp, clamped to [qmin, qmax].
    q = jnp.clip(jnp.round(x * inv_scale) + zero_point,
                 float(quant_min), float(quant_max))
    # q is already integral and inside the quant range, so the cast to the
    # integer quant dtype and back is a no-op numerically -> skip it.
    # dequantize_per_tensor: (q - zp) * scale.
    o_ref[...] = (q - zero_point) * scale


def quantize_dequantize_per_tensor(x, scale, zero_point, quant_min, quant_max,
                                   block_rows=BLOCK_ROWS):
    """Fake-quant round trip matching the decomposed quantized ops.

    x: float32 array of any shape (e.g. NCHW).  Returns float32, same shape.
    scale / zero_point / quant_min / quant_max are compile-time constants
    (they are fixed at module init in the PyTorch spec).
    """
    orig_shape = x.shape
    x = x.astype(jnp.float32)
    n = x.size

    # Present a lane-dense (rows, 128) slab.  No pad/slice pass when n % 128
    # == 0 (typical NCHW sizes); otherwise pad only the ragged tail.
    if n % LANES == 0:
        pad = 0
        rows = n // LANES
        x2d = x.reshape(rows, LANES)
    else:
        rows = -(-n // LANES)
        pad = rows * LANES - n
        x2d = jnp.pad(x.reshape(-1), (0, pad)).reshape(rows, LANES)

    if rows <= block_rows:
        # Single block equal to the full array dims (waives (8,128) rule).
        br = rows
    else:
        # Multiple of 8 sublanes; ragged last block is masked by Pallas.
        br = block_rows
    grid = (pl.cdiv(rows, br),)

    inv_scale = 1.0 / float(scale)
    kernel = functools.partial(
        _qdq_kernel,
        inv_scale=inv_scale,
        scale=float(scale),
        zero_point=float(zero_point),
        quant_min=quant_min,
        quant_max=quant_max,
    )

    out2d = pl.pallas_call(
        kernel,
        out_shape=jax.ShapeDtypeStruct((rows, LANES), jnp.float32),
        grid_spec=pltpu.PrefetchScalarGridSpec(
            num_scalar_prefetch=0,
            grid=grid,
            in_specs=[pl.BlockSpec((br, LANES), lambda i: (i, 0))],
            out_specs=pl.BlockSpec((br, LANES), lambda i: (i, 0)),
        ),
        compiler_params=pltpu.CompilerParams(
            dimension_semantics=("parallel",)),
        input_output_aliases={0: 0},  # fake-quant is naturally in-place
    )(x2d)

    out = out2d
    if pad:
        out = out.reshape(-1)[:n]
    return out.reshape(orig_shape)


def _reference(x, scale, zero_point, quant_min, quant_max):
    # Same multiply-by-inverse-scale formulation as the kernel (and as the
    # PyTorch decomposed op) so results bit-match.
    inv_scale = 1.0 / float(scale)
    q = jnp.clip(jnp.round(x * inv_scale) + zero_point, quant_min, quant_max)
    return (q - zero_point) * scale


if __name__ == "__main__":
    # Module config (typical test instantiation with dtype=torch.uint8)
    scale = 0.1
    zero_point = 3.0
    quant_min = 0
    quant_max = 255

    key = jax.random.PRNGKey(0)
    x = jax.random.normal(key, (2, 4, 16, 16), dtype=jnp.float32) * 5.0  # NCHW

    # Compute the reference before the (aliased) kernel call.
    ref = _reference(x, scale, zero_point, quant_min, quant_max)

    out = quantize_dequantize_per_tensor(x, scale, zero_point,
                                         quant_min, quant_max)
    out = jax.block_until_ready(out)

    assert out.shape == x.shape and out.dtype == jnp.float32
    assert jnp.max(jnp.abs(out - ref)) < 1e-5, "mismatch vs reference"

    print("KERNEL_OK")
</pallas_src>

<mosaic_0001>
module attributes {stable_mosaic.version = 11 : i64} {
  func.func @_qdq_kernel(%arg0: i32, %arg1: memref<16x128xf32, #tpu.memory_space<vmem>>, %arg2: memref<16x128xf32, #tpu.memory_space<vmem>>) attributes {dimension_semantics = [#tpu.dimension_semantics<parallel>], iteration_bounds = array<i64: 1>, scalar_prefetch = 0 : i64, scratch_operands = 0 : i64, tpu.core_type = #tpu.core_type<tc>, window_params = [{transform_indices = @transform_0, window_bounds = array<i64: 16, 128>}, {transform_indices = @transform_1, window_bounds = array<i64: 16, 128>}]} {
    %c0 = arith.constant 0 : index
    %c0_0 = arith.constant 0 : index
    %0 = vector.load %arg1[%c0, %c0_0] : memref<16x128xf32, #tpu.memory_space<vmem>>, vector<16x128xf32>
    %cst = arith.constant 1.000000e+01 : f32
    %1 = vector.broadcast %cst : f32 to vector<16x128xf32>
    %2 = arith.mulf %0, %1 : vector<16x128xf32>
    %3 = math.roundeven %2 : vector<16x128xf32>
    %cst_1 = arith.constant 3.000000e+00 : f32
    %4 = vector.broadcast %cst_1 : f32 to vector<16x128xf32>
    %5 = arith.addf %3, %4 : vector<16x128xf32>
    %cst_2 = arith.constant 0.000000e+00 : f32
    %cst_3 = arith.constant 2.550000e+02 : f32
    %6 = vector.broadcast %cst_2 : f32 to vector<16x128xf32>
    %7 = arith.maximumf %6, %5 : vector<16x128xf32>
    %8 = vector.broadcast %cst_3 : f32 to vector<16x128xf32>
    %9 = arith.minimumf %8, %7 : vector<16x128xf32>
    %cst_4 = arith.constant 3.000000e+00 : f32
    %10 = vector.broadcast %cst_4 : f32 to vector<16x128xf32>
    %11 = arith.subf %9, %10 : vector<16x128xf32>
    %cst_5 = arith.constant 1.000000e-01 : f32
    %12 = vector.broadcast %cst_5 : f32 to vector<16x128xf32>
    %13 = arith.mulf %11, %12 : vector<16x128xf32>
    %c0_6 = arith.constant 0 : index
    %c0_7 = arith.constant 0 : index
    %14 = vector.load %arg2[%c0_6, %c0_7] : memref<16x128xf32, #tpu.memory_space<vmem>>, vector<16x128xf32>
    tpu.vector_store %arg2[%c0_6, %c0_7], %13 {strides = array<i32>} : memref<16x128xf32, #tpu.memory_space<vmem>>, vector<16x128xf32>,
    return
  }
  func.func @transform_0(%arg0: i32) -> (i32, i32) {
    %c0_i32 = arith.constant 0 : i32
    %c0_i32_0 = arith.constant 0 : i32
    return %arg0, %c0_i32 : i32, i32
  }
  func.func @transform_1(%arg0: i32) -> (i32, i32) {
    %c0_i32 = arith.constant 0 : i32
    %c0_i32_0 = arith.constant 0 : i32
    return %arg0, %c0_i32 : i32, i32
  }
}

</mosaic_0001>

<llo_original>
// kernel: tpu_custom_call.1
$region0: #{tpu_custom_call.1}
  #allocation0 [shape = 'u32[]', space=smem, size = 0x4, offset = 0x4, fixed_abs, tag = 'smem constant byte address 0x4 - core index']
  #allocation1 [shape = 'u32[144,128]{1,0:T(1,128)}', space=vmem, size = 0x12000, scoped, tag = 'internal scratch']
  %s0 = inlined_call_operand.hbm [shape: f32[16,128], index: 0, kind: input, shape index: {}, may-alias: {0,1}]
  %s1 = inlined_call_operand.hbm [shape: f32[16,128], index: 1, kind: output, shape index: {}, may-alias: {0,1}]
  %s2 = sld [smem:[#allocation0]]
  $region18: #{tpu_custom_call.1} parent=0
    _
  %s4 = ssub.s32 1, %s2
  %s5 = scalar_select 0, %s4, %s2
  $region1: #{tpu_custom_call.1} parent=0
    #allocation2 [shape = 'u8[8192]{0}', space=vmem, size = 0x2000, scoped, tag = 'input window, operand 0, single buffered']
    #allocation3 [shape = 's32[1]{0}', space=sflag, size = 0x4, scoped, tag = 'scoped memory for tpu_custom_call.1']
    #allocation4 [shape = 's32[1]{0}', space=sflag, size = 0x4, scoped, tag = 'scoped memory for tpu_custom_call.1']
    #allocation5 [shape = 'u8[8192]{0}', space=vmem, size = 0x2000, scoped, tag = 'output window, operand 0, single buffered']
    %6 = vsyncpa [#allocation3], 0
    %7 = vsyncpa [#allocation4], 0
    // Predicated region
    $region2: #{tpu_custom_call.1} parent=1 // pred_check
      _
    $region3: #{tpu_custom_call.1} parent=1 // pred_check_branch
      %9 = sbr.rel (0) target = $region5
    $region4: #{tpu_custom_call.1} parent=1 // pred_region
      %s11 = ssub.s32 256, 256
      %12 = vsyncadd [#allocation3], %s11
      %s13 = sshll.u32 [#allocation2], 4
      %s14 = int_to_ptr.vmem [resolvable:$true] %s13
      %19 = dma.hbm_to_vmem [thread:$0]  %s0, 256, %s14, [#allocation3], 128, 128, 8
    $region5: #{tpu_custom_call.1} parent=1 // pred_fallthru
      _
    // Predicated region
    $region6: #{tpu_custom_call.1} parent=1 // pred_check
      _
    $region7: #{tpu_custom_call.1} parent=1 // pred_check_branch
      %21 = sbr.rel (0) target = $region9
    $region8: #{tpu_custom_call.1} parent=1 // pred_region
      %22 = dma.done [#allocation3], 256
    $region9: #{tpu_custom_call.1} parent=1 // pred_fallthru
      _
    %v23 = vld [vmem:[#allocation2] sm:$0xff]
    %v24 = vld [vmem:[#allocation2 + $0x8] sm:$0xff]
    %v25 = vmul.f32 %v23, 10.0
    %v26 = vmul.f32 %v24, 10.0
    %v27 = vround.ne.pseudo %v25
    %v28 = vround.ne.pseudo %v26
    %v29 = vadd.f32 %v27, 3.0
    %v30 = vadd.f32 %v28, 3.0
    %v31 = vmax.f32 %v29, 0.0
    %v32 = vmax.f32 %v30, 0.0
    %v33 = vmin.f32 %v31, 255.0
    %v34 = vmin.f32 %v32, 255.0
    %v35 = vsub.f32 %v33, 3.0
    %v36 = vsub.f32 %v34, 3.0
    %v37 = vmul.f32 %v35, 0.1
    %v38 = vmul.f32 %v36, 0.1
    %39 = vst [vmem:[#allocation5] sm:$0xff] %v37
    %40 = vst [vmem:[#allocation5 + $0x8] sm:$0xff] %v38
    // Predicated region
    $region10: #{tpu_custom_call.1} parent=1 // pred_check
      _
    $region11: #{tpu_custom_call.1} parent=1 // pred_check_branch
      %42 = sbr.rel (0) target = $region13
    $region12: #{tpu_custom_call.1} parent=1 // pred_region
      %s44 = ssub.s32 256, 256
      %45 = vsyncadd [#allocation4], %s44
      %s46 = sshll.u32 [#allocation5], 4
      %s47 = int_to_ptr.vmem [resolvable:$true] %s46
      %52 = dma.vmem_to_hbm [thread:$0]  %s47, 256, %s1, [#allocation4], 128, 128, 8
    $region13: #{tpu_custom_call.1} parent=1 // pred_fallthru
      _
    // Predicated region
    $region14: #{tpu_custom_call.1} parent=1 // pred_check
      _
    $region15: #{tpu_custom_call.1} parent=1 // pred_check_branch
      %54 = sbr.rel (0) target = $region17
    $region16: #{tpu_custom_call.1} parent=1 // pred_region
      %55 = dma.done [#allocation4], 256
    $region17: #{tpu_custom_call.1} parent=1 // pred_fallthru
      _
    %56 = vsyncpa [#allocation3], 1
    %57 = vsyncpa [#allocation4], 1

</llo_original>
